<compile_context>
chip_gen: v6e
topology: v6e:2x2x1
jax: 0.10.0
libtpu: 0.0.40
codegen_flags: <defaults>
</compile_context>

<pallas_src>
import jax
import jax.numpy as jnp
from jax.experimental import pallas as pl
from jax.experimental.pallas import tpu as pltpu


def _scale_residual_kernel(res_ref, x_ref, gate_ref, o_ref):
    # Elementwise gated residual on one VMEM tile.  jnp promotion handles mixed
    # input dtypes; cast to the (already promoted) output dtype before storing.
    o_ref[...] = (res_ref[...] + x_ref[...] * gate_ref[...]).astype(o_ref.dtype)


def _vmem_budget_bytes() -> int:
    """Generation-aware budget for the double-buffered pipelined footprint."""
    try:
        cap = int(pltpu.get_tpu_info().vmem_capacity_bytes)
    except Exception:
        cap = 64 << 20  # conservative fallback: v7x per-TC physical VMEM
    # ~cap/4, capped at 24 MiB (v5e/v6e: 24 MiB, v7x: 16 MiB), floored at 8 MiB.
    return int(min(max(cap // 4, 8 << 20), 24 << 20))


def _sublane_multiple(*dtypes) -> int:
    """Second-minor block alignment from the narrowest participating dtype."""
    min_item = min(jnp.dtype(d).itemsize for d in dtypes)
    return 8 * max(1, 4 // max(1, min_item))   # f32->8, bf16->16, int8->32


def _round_up(x: int, m: int) -> int:
    return ((x + m - 1) // m) * m


def _pick_row_tile(n_rows: int, bytes_per_row: int, sub: int,
                   budget_bytes: int, min_steps: int) -> int:
    """Row tile: sublane aligned, fits the double-buffered VMEM budget, and
    yields >= min_steps grid steps (pipeline overlap + TensorCore balance)."""
    if n_rows <= sub:
        return int(n_rows)  # block dim == full array dim: exempt from alignment
    # Largest aligned tile whose double-buffered streams fit the budget.
    tr_budget = max(sub, (budget_bytes // (2 * bytes_per_row)) // sub * sub)
    # Smallest aligned tile that still produces >= min_steps tiles.
    tr_balance = max(sub, _round_up(pl.cdiv(n_rows, min_steps), sub))
    tr = min(tr_budget, tr_balance)
    return int(min(tr, _round_up(n_rows, sub)))


def scale_residual(residual: jax.Array, x: jax.Array, gate: jax.Array,
                   *, tile_rows: int | None = None,
                   donate_residual: bool = False,
                   min_grid_steps: int = 8) -> jax.Array:
    """Pallas TPU implementation of `residual + x * gate`.

    residual, x: (B, S, D).  gate: (B, 1, D), (1, S, D), (B, S, D), (D,),
    (1, 1, D), (B, D) or (S, D).  `donate_residual=True` aliases residual->out
    inside the pallas_call; pair it with jit donate_argnums at the call site,
    otherwise XLA may insert a copy to preserve the live input.
    """
    assert residual.shape == x.shape, (residual.shape, x.shape)
    B, S, D = residual.shape

    # ---- normalize gate to (gB, gS, D) --------------------------------------
    if gate.ndim == 1:
        gate3 = gate.reshape(1, 1, D)
    elif gate.ndim == 2:
        n = gate.shape[0]
        if n == 1:
            gate3 = gate.reshape(1, 1, D)
        elif n == B:            # (B, D): per-batch gate (ambiguous iff S == B)
            gate3 = gate.reshape(B, 1, D)
        elif n == S:            # (S, D): per-sequence gate shared across batch
            gate3 = gate.reshape(1, S, D)
        else:
            raise ValueError(f"cannot interpret 2-D gate of shape {gate.shape}")
    else:
        gate3 = gate
    gB, gS, gD = gate3.shape
    assert gD == D and gB in (1, B) and gS in (1, S), f"bad gate shape {gate3.shape}"

    out_dtype = jnp.result_type(residual.dtype, x.dtype, gate3.dtype)
    sub = _sublane_multiple(residual.dtype, x.dtype, gate3.dtype, out_dtype)
    budget = _vmem_budget_bytes()

    # Bytes per output row contributed by the always-tiled streams.
    row_bytes = D * (residual.dtype.itemsize + x.dtype.itemsize
                     + jnp.dtype(out_dtype).itemsize)

    bytes_accessed = (residual.size * residual.dtype.itemsize
                      + x.size * x.dtype.itemsize
                      + gate3.size * gate3.dtype.itemsize
                      + residual.size * jnp.dtype(out_dtype).itemsize)
    cost = pl.CostEstimate(flops=2 * B * S * D, transcendentals=0,
                           bytes_accessed=int(bytes_accessed))

    io_aliases = {0: 0} if (donate_residual and residual.dtype == out_dtype) else {}

    # TODO(synk): if D % 128 != 0 the lane dim is not dense; pad D (or fold seq
    # into lanes for the full-gate case) for unmasked vst stores.  The block
    # below uses the full-array-dim exemption, which is correct but masked.

    flat_invariant = (gB == 1 and gS == 1)   # gate broadcasts over batch & seq
    flat_full = (gB == B and gS == S)        # gate is fully elementwise

    if flat_invariant or flat_full:
        # ---- flattened (B*S, D) path: one parallel axis, large 2-D tiles ----
        N = B * S
        res2 = residual.reshape(N, D)
        x2 = x.reshape(N, D)
        if flat_full:
            gate2 = gate3.reshape(N, D)
            row_bytes_all = row_bytes + D * gate3.dtype.itemsize
        else:
            gate2 = gate3.reshape(1, D)
            row_bytes_all = row_bytes

        tr = tile_rows if tile_rows is not None else _pick_row_tile(
            N, row_bytes_all, sub, budget, min_grid_steps)
        grid = (pl.cdiv(N, tr),)

        xs_spec = pl.BlockSpec((tr, D), lambda i: (i, 0))
        gate_spec = (pl.BlockSpec((tr, D), lambda i: (i, 0)) if flat_full
                     else pl.BlockSpec((1, D), lambda i: (0, 0)))

        footprint = 2 * tr * row_bytes_all
        if not flat_full:
            footprint += 2 * D * gate3.dtype.itemsize
        vmem_limit = int(min(32 << 20, max(16 << 20, footprint + (4 << 20))))

        out = pl.pallas_call(
            _scale_residual_kernel,
            out_shape=jax.ShapeDtypeStruct((N, D), out_dtype),
            grid_spec=pltpu.PrefetchScalarGridSpec(
                num_scalar_prefetch=0, grid=grid,
                in_specs=[xs_spec, xs_spec, gate_spec],
                out_specs=xs_spec),
            compiler_params=pltpu.CompilerParams(
                dimension_semantics=("parallel",),
                vmem_limit_bytes=vmem_limit),
            cost_estimate=cost,
            input_output_aliases=io_aliases,
        )(res2, x2, gate2)
        return out.reshape(B, S, D)

    # ---- 3-D path: gate broadcasts over seq (B,1,D) or over batch (1,S,D) ---
    row_bytes_all = row_bytes + (D * gate3.dtype.itemsize if gS == S else 0)
    min_seq_steps = max(1, pl.cdiv(min_grid_steps, B))
    ts = tile_rows if tile_rows is not None else _pick_row_tile(
        S, row_bytes_all, sub, budget, min_seq_steps)
    grid = (B, pl.cdiv(S, ts))

    xs_spec = pl.BlockSpec((1, ts, D), lambda b, i: (b, i, 0))
    if gS == S:       # (1, S, D): per-seq gate shared across batch
        gate_spec = pl.BlockSpec((1, ts, D), lambda b, i: (0, i, 0))
    else:             # (B, 1, D): per-batch gate, resident across the seq axis
        gate_spec = pl.BlockSpec((1, 1, D), lambda b, i: (b, 0, 0))

    footprint = 2 * ts * row_bytes_all + 2 * D * gate3.dtype.itemsize
    vmem_limit = int(min(32 << 20, max(16 << 20, footprint + (4 << 20))))

    return pl.pallas_call(
        _scale_residual_kernel,
        out_shape=jax.ShapeDtypeStruct((B, S, D), out_dtype),
        grid_spec=pltpu.PrefetchScalarGridSpec(
            num_scalar_prefetch=0, grid=grid,
            in_specs=[xs_spec, xs_spec, gate_spec],
            out_specs=xs_spec),
        compiler_params=pltpu.CompilerParams(
            dimension_semantics=("parallel", "parallel"),
            vmem_limit_bytes=vmem_limit),
        cost_estimate=cost,
        input_output_aliases=io_aliases,
    )(residual, x, gate3)


if __name__ == "__main__":
    key = jax.random.PRNGKey(0)
    k1, k2, k3, k4, k5 = jax.random.split(key, 5)

    B, S, D = 2, 8, 32
    residual = jax.random.normal(k1, (B, S, D), dtype=jnp.float32)
    x = jax.random.normal(k2, (B, S, D), dtype=jnp.float32)

    # Per-batch broadcast gate (B, 1, D) — 3-D grid path.
    gate_b = jax.random.normal(k3, (B, 1, D), dtype=jnp.float32)
    out = jax.block_until_ready(scale_residual(residual, x, gate_b))
    ref = residual + x * gate_b
    assert out.shape == ref.shape and out.dtype == ref.dtype
    assert jnp.allclose(out, ref, atol=1e-6, rtol=1e-6)

    # Full elementwise gate (B, S, D) — flattened (B*S, D) path.
    gate_f = jax.random.normal(k4, (B, S, D), dtype=jnp.float32)
    out_f = jax.block_until_ready(scale_residual(residual, x, gate_f))
    assert jnp.allclose(out_f, residual + x * gate_f, atol=1e-6, rtol=1e-6)

    # Globally shared gate (D,) — flattened path with a resident gate block.
    gate_g = jax.random.normal(k5, (D,), dtype=jnp.float32)
    out_g = jax.block_until_ready(scale_residual(residual, x, gate_g))
    assert jnp.allclose(out_g, residual + x * gate_g, atol=1e-6, rtol=1e-6)

    # Mixed dtypes: bf16 residual/x with f32 gate promote to f32 (as in JAX).
    res_bf = residual.astype(jnp.bfloat16)
    x_bf = x.astype(jnp.bfloat16)
    out_m = jax.block_until_ready(scale_residual(res_bf, x_bf, gate_b))
    ref_m = res_bf + x_bf * gate_b
    assert out_m.dtype == ref_m.dtype
    assert jnp.allclose(out_m, ref_m, atol=2e-2, rtol=2e-2)

    print("KERNEL_OK")
</pallas_src>

<mosaic_0001>
module attributes {stable_mosaic.version = 11 : i64} {
  func.func @_scale_residual_kernel(%arg0: i32, %arg1: i32, %arg2: memref<1x8x32xf32, #tpu.memory_space<vmem>>, %arg3: memref<1x8x32xf32, #tpu.memory_space<vmem>>, %arg4: memref<1x1x32xf32, #tpu.memory_space<vmem>>, %arg5: memref<1x8x32xf32, #tpu.memory_space<vmem>>) attributes {dimension_semantics = [#tpu.dimension_semantics<parallel>, #tpu.dimension_semantics<parallel>], iteration_bounds = array<i64: 2, 1>, scalar_prefetch = 0 : i64, scratch_operands = 0 : i64, tpu.core_type = #tpu.core_type<tc>, window_params = [{transform_indices = @transform_0, window_bounds = array<i64: 1, 8, 32>}, {transform_indices = @transform_1, window_bounds = array<i64: 1, 8, 32>}, {transform_indices = @transform_2, window_bounds = array<i64: 1, 1, 32>}, {transform_indices = @transform_3, window_bounds = array<i64: 1, 8, 32>}]} {
    %c0 = arith.constant 0 : index
    %c0_0 = arith.constant 0 : index
    %c0_1 = arith.constant 0 : index
    %0 = vector.load %arg2[%c0, %c0_0, %c0_1] : memref<1x8x32xf32, #tpu.memory_space<vmem>>, vector<1x8x32xf32>
    %c0_2 = arith.constant 0 : index
    %c0_3 = arith.constant 0 : index
    %c0_4 = arith.constant 0 : index
    %1 = vector.load %arg3[%c0_2, %c0_3, %c0_4] : memref<1x8x32xf32, #tpu.memory_space<vmem>>, vector<1x8x32xf32>
    %c0_5 = arith.constant 0 : index
    %c0_6 = arith.constant 0 : index
    %c0_7 = arith.constant 0 : index
    %2 = vector.load %arg4[%c0_5, %c0_6, %c0_7] : memref<1x1x32xf32, #tpu.memory_space<vmem>>, vector<1x1x32xf32>
    %3 = vector.broadcast %2 : vector<1x1x32xf32> to vector<1x8x32xf32>
    %4 = arith.mulf %1, %3 : vector<1x8x32xf32>
    %5 = arith.addf %0, %4 : vector<1x8x32xf32>
    %c0_8 = arith.constant 0 : index
    %c0_9 = arith.constant 0 : index
    %c0_10 = arith.constant 0 : index
    %6 = vector.load %arg5[%c0_8, %c0_9, %c0_10] : memref<1x8x32xf32, #tpu.memory_space<vmem>>, vector<1x8x32xf32>
    tpu.vector_store %arg5[%c0_8, %c0_9, %c0_10], %5 {strides = array<i32>} : memref<1x8x32xf32, #tpu.memory_space<vmem>>, vector<1x8x32xf32>,
    return
  }
  func.func @transform_0(%arg0: i32, %arg1: i32) -> (i32, i32, i32) {
    %c0_i32 = arith.constant 0 : i32
    %c0_i32_0 = arith.constant 0 : i32
    return %arg0, %arg1, %c0_i32 : i32, i32, i32
  }
  func.func @transform_1(%arg0: i32, %arg1: i32) -> (i32, i32, i32) {
    %c0_i32 = arith.constant 0 : i32
    %c0_i32_0 = arith.constant 0 : i32
    return %arg0, %arg1, %c0_i32 : i32, i32, i32
  }
  func.func @transform_2(%arg0: i32, %arg1: i32) -> (i32, i32, i32) {
    %c0_i32 = arith.constant 0 : i32
    %c0_i32_0 = arith.constant 0 : i32
    %c0_i32_1 = arith.constant 0 : i32
    return %arg0, %c0_i32, %c0_i32_0 : i32, i32, i32
  }
  func.func @transform_3(%arg0: i32, %arg1: i32) -> (i32, i32, i32) {
    %c0_i32 = arith.constant 0 : i32
    %c0_i32_0 = arith.constant 0 : i32
    return %arg0, %arg1, %c0_i32 : i32, i32, i32
  }
}

</mosaic_0001>

<llo_original>
// kernel: tpu_custom_call.1
$region0: #{tpu_custom_call.1}
  #allocation0 [shape = 'u32[]', space=smem, size = 0x4, offset = 0x4, fixed_abs, tag = 'smem constant byte address 0x4 - core index']
  #allocation1 [shape = 'u32[144,128]{1,0:T(1,128)}', space=vmem, size = 0x12000, scoped, tag = 'internal scratch']
  %s0 = inlined_call_operand.hbm [shape: f32[2,8,32], index: 0, kind: input, shape index: {}]
  %s1 = inlined_call_operand.hbm [shape: f32[2,8,32], index: 1, kind: input, shape index: {}]
  %s2 = inlined_call_operand.vmem [shape: f32[2,1,32], index: 2, kind: input, shape index: {}]
  %s3 = inlined_call_operand.hbm [shape: f32[2,8,32], index: 3, kind: output, shape index: {}]
  %s4 = sld [smem:[#allocation0]]
  $region53: #{tpu_custom_call.1} parent=0
    _
  %s6 = ssub.s32 1, %s4
  %s7 = scalar_select 0, %s6, %s4
  $region1: #{tpu_custom_call.1} parent=0
    #allocation2 [shape = 'u8[8192]{0}', space=vmem, size = 0x2000, scoped, tag = 'input window, operand 0']
    #allocation3 [shape = 's32[2]{0}', space=sflag, size = 0x8, scoped, tag = 'scoped memory for tpu_custom_call.1']
    #allocation4 [shape = 's32[2]{0}', space=sflag, size = 0x8, scoped, tag = 'scoped memory for tpu_custom_call.1']
    #allocation5 [shape = 'u8[8192]{0}', space=vmem, size = 0x2000, scoped, tag = 'input window, operand 1']
    #allocation6 [shape = 's32[2]{0}', space=sflag, size = 0x8, scoped, tag = 'scoped memory for tpu_custom_call.1']
    #allocation7 [shape = 'u8[8192]{0}', space=vmem, size = 0x2000, scoped, tag = 'output window, operand 0']
    %8 = vsyncpa [#allocation3], 0
    %s9 = scalar_lea.sflag [#allocation3], 1
    %10 = vsyncpa %s9, 0
    %11 = vsyncpa [#allocation6], 0
    %s12 = scalar_lea.sflag [#allocation6], 1
    %13 = vsyncpa %s12, 0
    %14 = vsyncpa [#allocation4], 0
    %s15 = scalar_lea.sflag [#allocation4], 1
    %16 = vsyncpa %s15, 0
    loop: start=0, step=1, limit=4
    $region2: #{tpu_custom_call.1} parent=1 // loop_pre_header
      _
    $region3: #{tpu_custom_call.1} parent=1 // loop_header
      %s18 = sphi 0, %s22
      %p19 = scmp.ge.s32.totalorder %s18, 4
      %s25 = sphi 0, %s37
      %s26 = sphi 0, %s33
      %s27 = sphi 0, %s25
      %s28 = sphi 0, %s26
      %s29 = sphi 0, %s27
      %s30 = sphi 0, %s28
      %s42 = sphi 0, %s44
      %s45 = sphi 0, %s42
      %s46 = sphi 0, %s45
      %s62 = sphi 0, %s46
      %s70 = sphi 0, %s72
      %s73 = sphi 0, %s70
      %s74 = sphi 0, %s73
      %s90 = sphi 0, %s74
      %s96 = sphi 0, %s98
      %s99 = sphi 0, %s96
      %s100 = sphi 0, %s99
      %s116 = sphi 0, %s100
      %s124 = sphi 0, %s126
      %s127 = sphi 0, %s124
      %s128 = sphi 0, %s127
      %s144 = sphi 0, %s128
    $region4: #{tpu_custom_call.1} parent=1 // loop_header_branch
      %21 = sbr.rel (%p19) target = $region8
    $region5: #{tpu_custom_call.1} parent=1 // loop_body
      %s23 = ssub.s32 %s18, 1
      %s24 = ssub.s32 %s18, 2
      %s31 = sadd.s32 1, %s26
      %p32 = scmp.ge.s32.totalorder %s31, 1
      %s33 = scalar_select %p32, 0, %s31
      %s34 = sadd.s32 1, %s25
      %s35 = scalar_select %p32, %s34, %s25
      %p36 = scmp.ge.s32.totalorder %s35, 2
      %s37 = scalar_select %p36, 0, %s35
      %s38 = ssub.s32 %s25, %s37
      %s39 = ssub.s32 %s26, %s33
      %s40 = sor.u32 %s38, %s39
      %p41 = scmp.eq.s32.totalorder %s40, 0
      %s43 = sadd.s32 %s42, 1
      %s44 = scalar_select %p41, %s42, %s43
      %p47 = pneg %p41
      %p48 = scmp.eq.s32.totalorder %s18, 1
      %p49 = por %p47, %p48
      %p50 = scmp.ne.s32.totalorder %s42, %s45
      %p51 = scmp.eq.s32.totalorder %s18, 0
      %p52 = por %p50, %p51
      %p53 = scmp.ne.s32.totalorder %s42, %s45
      %p54 = scmp.eq.s32.totalorder %s23, 1
      %p55 = por %p53, %p54
      %p56 = scmp.ne.s32.totalorder %s45, %s46
      %p57 = scmp.eq.s32.totalorder %s23, 0
      %p58 = por %p56, %p57
      %p59 = scmp.ne.s32.totalorder %s45, %s46
      %p60 = scmp.eq.s32.totalorder %s24, 1
      %p61 = por %p59, %p60
      %p63 = scmp.ne.s32.totalorder %s46, %s62
      %p64 = scmp.eq.s32.totalorder %s24, 0
      %p65 = por %p63, %p64
      %s66 = ssub.s32 %s25, %s37
      %s67 = ssub.s32 %s26, %s33
      %s68 = sor.u32 %s66, %s67
      %p69 = scmp.eq.s32.totalorder %s68, 0
      %s71 = sadd.s32 %s70, 1
      %s72 = scalar_select %p69, %s70, %s71
      %p75 = pneg %p69
      %p76 = scmp.eq.s32.totalorder %s18, 1
      %p77 = por %p75, %p76
      %p78 = scmp.ne.s32.totalorder %s70, %s73
      %p79 = scmp.eq.s32.totalorder %s18, 0
      %p80 = por %p78, %p79
      %p81 = scmp.ne.s32.totalorder %s70, %s73
      %p82 = scmp.eq.s32.totalorder %s23, 1
      %p83 = por %p81, %p82
      %p84 = scmp.ne.s32.totalorder %s73, %s74
      %p85 = scmp.eq.s32.totalorder %s23, 0
      %p86 = por %p84, %p85
      %p87 = scmp.ne.s32.totalorder %s73, %s74
      %p88 = scmp.eq.s32.totalorder %s24, 1
      %p89 = por %p87, %p88
      %p91 = scmp.ne.s32.totalorder %s74, %s90
      %p92 = scmp.eq.s32.totalorder %s24, 0
      %p93 = por %p91, %p92
      %s94 = ssub.s32 %s25, %s37
      %p95 = scmp.eq.s32.totalorder %s94, 0
      %s97 = sadd.s32 %s96, 1
      %s98 = scalar_select %p95, %s96, %s97
      %p101 = pneg %p95
      %p102 = scmp.eq.s32.totalorder %s18, 1
      %p103 = por %p101, %p102
      %p104 = scmp.ne.s32.totalorder %s96, %s99
      %p105 = scmp.eq.s32.totalorder %s18, 0
      %p106 = por %p104, %p105
      %p107 = scmp.ne.s32.totalorder %s96, %s99
      %p108 = scmp.eq.s32.totalorder %s23, 1
      %p109 = por %p107, %p108
      %p110 = scmp.ne.s32.totalorder %s99, %s100
      %p111 = scmp.eq.s32.totalorder %s23, 0
      %p112 = por %p110, %p111
      %p113 = scmp.ne.s32.totalorder %s99, %s100
      %p114 = scmp.eq.s32.totalorder %s24, 1
      %p115 = por %p113, %p114
      %p117 = scmp.ne.s32.totalorder %s100, %s116
      %p118 = scmp.eq.s32.totalorder %s24, 0
      %p119 = por %p117, %p118
      %s120 = ssub.s32 %s25, %s37
      %s121 = ssub.s32 %s26, %s33
      %s122 = sor.u32 %s120, %s121
      %p123 = scmp.eq.s32.totalorder %s122, 0
      %s125 = sadd.s32 %s124, 1
      %s126 = scalar_select %p123, %s124, %s125
      %p129 = pneg %p123
      %p130 = scmp.eq.s32.totalorder %s18, 1
      %p131 = por %p129, %p130
      %p132 = scmp.ne.s32.totalorder %s124, %s127
      %p133 = scmp.eq.s32.totalorder %s18, 0
      %p134 = por %p132, %p133
      %p135 = scmp.ne.s32.totalorder %s124, %s127
      %p136 = scmp.eq.s32.totalorder %s23, 1
      %p137 = por %p135, %p136
      %p138 = scmp.ne.s32.totalorder %s127, %s128
      %p139 = scmp.eq.s32.totalorder %s23, 0
      %p140 = por %p138, %p139
      %p141 = scmp.ne.s32.totalorder %s127, %s128
      %p142 = scmp.eq.s32.totalorder %s24, 1
      %p143 = por %p141, %p142
      %p145 = scmp.ne.s32.totalorder %s128, %s144
      %p146 = scmp.eq.s32.totalorder %s24, 0
      %p147 = por %p145, %p146
      %p148 = scmp.le.s32.totalorder 1, %s18
      %p149 = scmp.lt.s32.totalorder %s18, 3
      %p150 = pnand %p148, %p149
      %p151 = pneg %p150
      // Predicated region
      $region9: #{tpu_custom_call.1} parent=5 // pred_check
        _
      $region10: #{tpu_custom_call.1} parent=5 // pred_check_branch
        %153 = sbr.rel (%p150) target = $region12
      $region11: #{tpu_custom_call.1} parent=5 // pred_region
        %s154 = ssub.s32 %s18, 1
      $region12: #{tpu_custom_call.1} parent=5 // pred_fallthru
        _
      %p155 = scmp.lt.s32.totalorder %s18, 2
      // Predicated region
      $region13: #{tpu_custom_call.1} parent=5 // pred_check
        %p156 = pneg %p155
      $region14: #{tpu_custom_call.1} parent=5 // pred_check_branch
        %158 = sbr.rel (%p156) target = $region16
      $region15: #{tpu_custom_call.1} parent=5 // pred_region
        // Predicated region
        $region17: #{tpu_custom_call.1} parent=15 // pred_check
          %p159 = pneg %p52
        $region18: #{tpu_custom_call.1} parent=15 // pred_check_branch
          %161 = sbr.rel (%p159) target = $region20
        $region19: #{tpu_custom_call.1} parent=15 // pred_region
          %s162 = sand.u32 %s42, 1
          %s163 = scalar_lea.sflag [#allocation3], %s162
          %s164 = sand.u32 %s42, 1
          %s165 = smul.addr %s164, 8
          %s166 = scalar_lea.vmem [#allocation2], %s165
          %s168 = ssub.s32 128, 128
          %169 = vsyncadd %s163, %s168
          %s170 = sadd.s32 %s26, %s25
          %s171 = smul.addr %s170, 128
          %s172 = scalar_lea.hbm %s0, %s171
          %s174 = sshll.u32 %s166, 4
          %s175 = int_to_ptr.vmem [resolvable:$true] %s174
          %177 = dma.hbm_to_vmem [thread:$0]  %s172, 128, %s175, %s163
        $region20: #{tpu_custom_call.1} parent=15 // pred_fallthru
          _
        // Predicated region
        $region21: #{tpu_custom_call.1} parent=15 // pred_check
          %p178 = pneg %p80
        $region22: #{tpu_custom_call.1} parent=15 // pred_check_branch
          %180 = sbr.rel (%p178) target = $region24
        $region23: #{tpu_custom_call.1} parent=15 // pred_region
          %s181 = sand.u32 %s70, 1
          %s182 = scalar_lea.sflag [#allocation6], %s181
          %s183 = sand.u32 %s70, 1
          %s184 = smul.addr %s183, 8
          %s185 = scalar_lea.vmem [#allocation5], %s184
          %s187 = ssub.s32 128, 128
          %188 = vsyncadd %s182, %s187
          %s189 = sadd.s32 %s26, %s25
          %s190 = smul.addr %s189, 128
          %s191 = scalar_lea.hbm %s1, %s190
          %s193 = sshll.u32 %s185, 4
          %s194 = int_to_ptr.vmem [resolvable:$true] %s193
          %196 = dma.hbm_to_vmem [thread:$0]  %s191, 128, %s194, %s182
        $region24: #{tpu_custom_call.1} parent=15 // pred_fallthru
          _
        // Predicated region
        $region25: #{tpu_custom_call.1} parent=15 // pred_check
          %p197 = pneg %p106
        $region26: #{tpu_custom_call.1} parent=15 // pred_check_branch
          %199 = sbr.rel (%p197) target = $region28
        $region27: #{tpu_custom_call.1} parent=15 // pred_region
          %p200 = scmp.lt.s32.totalorder %s25, 1
          %s201 = scalar_select %p200, %s25, 1
          %s202 = scalar_lea.vmem %s2, %s201
        $region28: #{tpu_custom_call.1} parent=15 // pred_fallthru
          _
      $region16: #{tpu_custom_call.1} parent=5 // pred_fallthru
        _
      %p203 = scmp.le.s32.totalorder 1, %s18
      %p204 = scmp.lt.s32.totalorder %s18, 3
      %p205 = pnand %p203, %p204
      %p206 = pneg %p205
      // Predicated region
      $region29: #{tpu_custom_call.1} parent=5 // pred_check
        _
      $region30: #{tpu_custom_call.1} parent=5 // pred_check_branch
        %208 = sbr.rel (%p205) target = $region32
      $region31: #{tpu_custom_call.1} parent=5 // pred_region
        %s209 = ssub.s32 %s18, 1
        %s210 = sand.u32 %s45, 1
        %s211 = scalar_lea.sflag [#allocation3], %s210
        %s212 = sand.u32 %s45, 1
        %s213 = smul.addr %s212, 8
        %s214 = scalar_lea.vmem [#allocation2], %s213
        // Predicated region
        $region33: #{tpu_custom_call.1} parent=31 // pred_check
          %p215 = pneg %p58
        $region34: #{tpu_custom_call.1} parent=31 // pred_check_branch
          %217 = sbr.rel (%p215) target = $region36
        $region35: #{tpu_custom_call.1} parent=31 // pred_region
          %218 = dma.done %s211, 128
        $region36: #{tpu_custom_call.1} parent=31 // pred_fallthru
          _
        %s219 = sand.u32 %s73, 1
        %s220 = scalar_lea.sflag [#allocation6], %s219
        %s221 = sand.u32 %s73, 1
        %s222 = smul.addr %s221, 8
        %s223 = scalar_lea.vmem [#allocation5], %s222
        // Predicated region
        $region37: #{tpu_custom_call.1} parent=31 // pred_check
          %p224 = pneg %p86
        $region38: #{tpu_custom_call.1} parent=31 // pred_check_branch
          %226 = sbr.rel (%p224) target = $region40
        $region39: #{tpu_custom_call.1} parent=31 // pred_region
          %227 = dma.done %s220, 128
        $region40: #{tpu_custom_call.1} parent=31 // pred_fallthru
          _
        %s228 = sand.u32 %s45, 1
        %s229 = scalar_lea.sflag [#allocation3], %s228
        %s230 = sand.u32 %s45, 1
        %s231 = smul.addr %s230, 8
        %s232 = scalar_lea.vmem [#allocation2], %s231
        %p233 = pneg %p58
        %p234 = pneg %p55
        %s235 = sand.u32 %s73, 1
        %s236 = scalar_lea.sflag [#allocation6], %s235
        %s237 = sand.u32 %s73, 1
        %s238 = smul.addr %s237, 8
        %s239 = scalar_lea.vmem [#allocation5], %s238
        %p240 = pneg %p86
        %p241 = pneg %p83
        %p242 = scmp.lt.s32.totalorder %s27, 1
        %s243 = scalar_select %p242, %s27, 1
        %s244 = scalar_lea.vmem %s2, %s243
        %p245 = pneg %p112
        %p246 = pneg %p109
        %p247 = pneg %p140
        %p248 = pneg %p137
        %s249 = sand.u32 %s127, 1
        %s250 = scalar_lea.sflag [#allocation4], %s249
        %s251 = sand.u32 %s127, 1
        %s252 = smul.addr %s251, 8
        %s253 = scalar_lea.vmem [#allocation7], %s252
        %p254 = scmp.lt.s32.totalorder %s27, 1
        %s255 = scalar_select %p254, %s27, 1
        %s256 = scalar_lea.vmem %s2, %s255
        %v257 = vld [vmem:[%s214] sm:$0xff]
        %v258 = vld [vmem:[%s223] sm:$0xff]
        %v259 = vld [vmem:[%s256] sm:$0x1]
        %v261 = vlaneseq
        %v262 = vshrl.u32 %v261, 7
        %v263 = vsub.s32 0, %v262
        %v264 = vrot.slane %v259, %v263
        %v266 = vmul.f32 %v258, %v264
        %v267 = vadd.f32 %v257, %v266
        %vm268 = vcmask 261120
        %269 = vst.msk [vmem:[%s253] sm:$0xff] %vm268, %v267
        %s270 = sand.u32 %s127, 1
        %s271 = scalar_lea.sflag [#allocation4], %s270
        %s272 = sand.u32 %s127, 1
        %s273 = smul.addr %s272, 8
        %s274 = scalar_lea.vmem [#allocation7], %s273
        // Predicated region
        $region41: #{tpu_custom_call.1} parent=31 // pred_check
          %p275 = pneg %p137
        $region42: #{tpu_custom_call.1} parent=31 // pred_check_branch
          %277 = sbr.rel (%p275) target = $region44
        $region43: #{tpu_custom_call.1} parent=31 // pred_region
          %s279 = ssub.s32 128, 128
          %280 = vsyncadd %s271, %s279
          %s281 = sadd.s32 %s28, %s27
          %s282 = smul.addr %s281, 128
          %s283 = scalar_lea.hbm %s3, %s282
          %s285 = sshll.u32 %s274, 4
          %s286 = int_to_ptr.vmem [resolvable:$true] %s285
          %288 = dma.vmem_to_hbm [thread:$0]  %s286, 128, %s283, %s271
        $region44: #{tpu_custom_call.1} parent=31 // pred_fallthru
          _
      $region32: #{tpu_custom_call.1} parent=5 // pred_fallthru
        _
      %p289 = scmp.le.s32.totalorder 2, %s18
      // Predicated region
      $region45: #{tpu_custom_call.1} parent=5 // pred_check
        %p290 = pneg %p289
      $region46: #{tpu_custom_call.1} parent=5 // pred_check_branch
        %292 = sbr.rel (%p290) target = $region48
      $region47: #{tpu_custom_call.1} parent=5 // pred_region
        %s293 = ssub.s32 %s18, 2
        // Predicated region
        $region49: #{tpu_custom_call.1} parent=47 // pred_check
          %p294 = pneg %p143
        $region50: #{tpu_custom_call.1} parent=47 // pred_check_branch
          %296 = sbr.rel (%p294) target = $region52
        $region51: #{tpu_custom_call.1} parent=47 // pred_region
          %s297 = sand.u32 %s128, 1
          %s298 = scalar_lea.sflag [#allocation4], %s297
          %s299 = sand.u32 %s128, 1
          %s300 = smul.addr %s299, 8
          %s301 = scalar_lea.vmem [#allocation7], %s300
          %302 = dma.done %s298, 128
        $region52: #{tpu_custom_call.1} parent=47 // pred_fallthru
          _
      $region48: #{tpu_custom_call.1} parent=5 // pred_fallthru
        _
    $region6: #{tpu_custom_call.1} parent=1 // loop_footer
      %s22 = sadd.s32 1, %s18
    $region7: #{tpu_custom_call.1} parent=1 // loop_footer_branch
      %17 = sbr.rel target = $region3
    $region8: #{tpu_custom_call.1} parent=1 // loop_exit
      _
    %303 = vsyncpa [#allocation3], 1
    %s304 = scalar_lea.sflag [#allocation3], 1
    %305 = vsyncpa %s304, 1
    %306 = vsyncpa [#allocation6], 1
    %s307 = scalar_lea.sflag [#allocation6], 1
    %308 = vsyncpa %s307, 1
    %309 = vsyncpa [#allocation4], 1
    %s310 = scalar_lea.sflag [#allocation4], 1
    %311 = vsyncpa %s310, 1

</llo_original>
